<compile_context>
chip_gen: v6e
topology: v6e:2x2x1
jax: 0.10.0
libtpu: 0.0.40
codegen_flags: <defaults>
</compile_context>

<pallas_src>
import functools
import math

import jax
import jax.numpy as jnp
from jax.experimental import pallas as pl
from jax.experimental.pallas import tpu as pltpu

# Per-block byte targets.  v7x has only 64 MiB VMEM per TensorCore, so cap at
# ~4 MiB/block (~24 MiB resident IO with double buffering); v5e/v6e have
# 128 MiB, so go larger to cut grid-step overhead further.
_V7X_BLOCK_BYTES = 4 * 1024 * 1024
_BIG_VMEM_BLOCK_BYTES = 6 * 1024 * 1024


def _vmem_capacity_bytes():
    # Best-effort hardware query; fall back to the most conservative
    # (v7x-sized) capacity if unavailable on this backend / jax build.
    try:
        info = pltpu.get_tpu_info()
        cap = int(getattr(info, "vmem_capacity_bytes", 0))
        if cap > 0:
            return cap
    except Exception:
        pass
    return 64 * 1024 * 1024


@functools.lru_cache(maxsize=None)
def _target_block_bytes():
    cap = _vmem_capacity_bytes()
    return _BIG_VMEM_BLOCK_BYTES if cap >= 96 * 1024 * 1024 else _V7X_BLOCK_BYTES


def _vmem_limit_bytes(tr, tc, itemsize):
    # a + b + out blocks, double-buffered, plus headroom for f32 elementwise
    # temporaries and Mosaic scratch — instead of requesting all of VMEM.
    block_bytes = tr * tc * itemsize
    io_resident = 3 * 2 * block_bytes
    temporaries = 3 * tr * tc * 4
    limit = int(1.25 * (io_resident + temporaries))
    cap = _vmem_capacity_bytes()
    limit = min(limit, cap - 8 * 1024 * 1024)   # never ask for the whole chip
    return max(limit, 16 * 1024 * 1024)


def _cost_estimate(rows, n, half, itemsize):
    out_elems = rows * half
    return pl.CostEstimate(
        flops=5 * out_elems,                     # mul, mul, add-ish per element
        transcendentals=out_elems,               # one exp per gate element
        bytes_accessed=(rows * n + rows * half) * itemsize,
    )


# ---------------------------------------------------------------------------
# Kernels
# ---------------------------------------------------------------------------

def _silu_gate(a, b, out_dtype):
    # a * silu(b). Sub-f32 dtypes are computed in f32: mandatory on v5e (no
    # bf16 VPU/EUP path); on v6e/v7x the upcast is hidden under the HBM
    # roofline for this memory-bound kernel.
    if a.dtype == jnp.float32:
        out = a * (b * jax.nn.sigmoid(b))
    else:
        bf = b.astype(jnp.float32)
        out = a.astype(jnp.float32) * (bf * jax.nn.sigmoid(bf))
    return out.astype(out_dtype)


def _swiglu_split_kernel(a_ref, b_ref, o_ref):
    # Fast path: the a/b split already happened in the BlockSpec index_maps.
    o_ref[...] = _silu_gate(a_ref[...], b_ref[...], o_ref.dtype)


def _swiglu_fused_kernel(x_ref, o_ref):
    # Fallback path for half-widths that are not 128-multiples (toy shapes).
    # TODO(synk): if a large unaligned half ever becomes hot, pad it up to a
    # 128 multiple in the wrapper instead of this unaligned in-kernel slice.
    x = x_ref[...]
    half = x.shape[-1] // 2
    o_ref[...] = _silu_gate(x[:, :half], x[:, half:], o_ref.dtype)


# ---------------------------------------------------------------------------
# Tile selection
# ---------------------------------------------------------------------------

def _sublane_mult(itemsize):
    # f32 -> 8, bf16 -> 16, int8/fp8 -> 32 rows per packed sublane tile.
    return 8 * max(1, 4 // itemsize)


def _choose_col_tile(half, itemsize, target_bytes):
    # Largest 128-multiple divisor of `half` that still leaves room for >= 8
    # rows inside the per-block byte budget.
    max_tc = max(128, min(half, (target_bytes // itemsize) // 8))
    if half <= max_tc:
        return half
    tc = (max_tc // 128) * 128
    while half % tc != 0:
        tc -= 128
    return tc


def _choose_row_tile(rows, cols, itemsize, target_bytes):
    sub = _sublane_mult(itemsize)
    target_rows = max(sub, target_bytes // max(1, cols * itemsize))
    tr = min(rows, target_rows)
    if tr < rows:
        # Not the full dim -> keep it a multiple of the sublane packing.
        tr = max(sub, (tr // sub) * sub)
    return tr


def _split_cols_for_two_blocks(half):
    # Largest 128-multiple divisor tc of `half` with half // tc >= 2.
    k = half // 128
    for d in range(2, k + 1):
        if k % d == 0:
            return (k // d) * 128
    return None


def _choose_tiles(rows, half, itemsize):
    target = _target_block_bytes()
    tc = _choose_col_tile(half, itemsize, target)
    tr = _choose_row_tile(rows, tc, itemsize, target)
    # v7x has 2 TensorCores sharing the grid via dimension_semantics: make
    # sure the parallel grid has >= 2 blocks so one core never sits idle on
    # small-row (decode-style) inputs.  Prefer splitting columns (keeps row
    # contiguity); fall back to splitting rows when half == 128.
    n_row_blocks = -(-rows // tr)
    if n_row_blocks == 1 and half // tc == 1:
        tc2 = _split_cols_for_two_blocks(half)
        if tc2 is not None:
            tc = tc2
        else:
            sub = _sublane_mult(itemsize)
            tr2 = max(sub, (((rows + 1) // 2 + sub - 1) // sub) * sub)
            if tr2 < rows:
                tr = tr2
    return tr, tc


# ---------------------------------------------------------------------------
# Public wrapper
# ---------------------------------------------------------------------------

def swiglu(x, dim: int = -1):
    """Pallas SwiGLU: split `x` in half along `dim`, return a * silu(b).

    The PyTorch module's forward hard-codes dim=-1 (its `self.dim` is unused),
    so the default matches it exactly. Other `dim`s are handled by a wrapper
    transpose (glue only, not part of the kernel hot path).
    """
    ndim = x.ndim
    dim = dim % ndim
    if dim != ndim - 1:
        # TODO(synk): fold this transpose into the BlockSpec index_map if a
        # non-last split axis ever becomes hot — this is a full XLA transpose
        # outside the kernel.
        x = jnp.moveaxis(x, dim, -1)

    lead_shape = x.shape[:-1]
    n = x.shape[-1]
    assert n % 2 == 0, "split axis must be even for chunk(2)"
    half = n // 2

    rows = int(math.prod(lead_shape)) if lead_shape else 1
    x2d = x.reshape(rows, n)
    itemsize = jnp.dtype(x.dtype).itemsize
    cost = _cost_estimate(rows, n, half, itemsize)

    if half % 128 == 0:
        # ---- Fast path: DMA-side a/b split, lane-dense 2-D blocks. ----
        # NOTE: the two BlockSpecs below are read-only aliases of the same
        # array; do not convert them into input_output_aliases.
        tr, tc = _choose_tiles(rows, half, itemsize)
        n_col_blocks = half // tc
        out2d = pl.pallas_call(
            _swiglu_split_kernel,
            out_shape=jax.ShapeDtypeStruct((rows, half), x.dtype),
            grid_spec=pltpu.PrefetchScalarGridSpec(
                num_scalar_prefetch=0,
                grid=(pl.cdiv(rows, tr), n_col_blocks),
                in_specs=[
                    # a: left half of x2d.
                    pl.BlockSpec((tr, tc), lambda i, j: (i, j)),
                    # b: right half of x2d (offset by half, in block units).
                    pl.BlockSpec((tr, tc), lambda i, j: (i, j + n_col_blocks)),
                ],
                out_specs=pl.BlockSpec((tr, tc), lambda i, j: (i, j)),
            ),
            compiler_params=pltpu.CompilerParams(
                dimension_semantics=("parallel", "parallel"),
                vmem_limit_bytes=_vmem_limit_bytes(tr, tc, itemsize),
            ),
            cost_estimate=cost,
        )(x2d, x2d)
    else:
        # ---- Small / unaligned half: full-width block, in-kernel split. ----
        tr = _choose_row_tile(rows, n, itemsize, _target_block_bytes())
        out2d = pl.pallas_call(
            _swiglu_fused_kernel,
            out_shape=jax.ShapeDtypeStruct((rows, half), x.dtype),
            grid_spec=pltpu.PrefetchScalarGridSpec(
                num_scalar_prefetch=0,
                grid=(pl.cdiv(rows, tr),),
                in_specs=[pl.BlockSpec((tr, n), lambda i: (i, 0))],
                out_specs=pl.BlockSpec((tr, half), lambda i: (i, 0)),
            ),
            compiler_params=pltpu.CompilerParams(
                dimension_semantics=("parallel",),
                vmem_limit_bytes=_vmem_limit_bytes(tr, n, itemsize),
            ),
            cost_estimate=cost,
        )(x2d)

    out = out2d.reshape(*lead_shape, half)
    if dim != ndim - 1:
        out = jnp.moveaxis(out, -1, dim)
    return out


def _ref_swiglu(x):
    a, b = jnp.split(x, 2, axis=-1)
    return a * (b * jax.nn.sigmoid(b))


if __name__ == "__main__":
    key = jax.random.PRNGKey(0)

    # 1) Module example shape (3, 20, 20): half=10 -> fused fallback path.
    x1 = jax.random.normal(key, (3, 20, 20), dtype=jnp.float32)
    y1 = jax.block_until_ready(swiglu(x1))
    assert y1.shape == (3, 20, 10), y1.shape
    assert jnp.allclose(y1, _ref_swiglu(x1), atol=1e-5, rtol=1e-5)

    # 2) 128-aligned half (256): BlockSpec-split fast path; also exercises the
    #    forced >=2-parallel-block logic (grid would otherwise be (1, 1)).
    x2 = jax.random.normal(jax.random.fold_in(key, 1), (2, 8, 512),
                           dtype=jnp.float32)
    y2 = jax.block_until_ready(swiglu(x2))
    assert y2.shape == (2, 8, 256), y2.shape
    assert jnp.allclose(y2, _ref_swiglu(x2), atol=1e-5, rtol=1e-5)

    # 3) bf16 on the fast path (f32 compute, bf16 store).
    x3 = x2.astype(jnp.bfloat16)
    y3 = jax.block_until_ready(swiglu(x3))
    ref3 = _ref_swiglu(x3.astype(jnp.float32)).astype(jnp.bfloat16)
    assert y3.dtype == jnp.bfloat16
    assert jnp.allclose(y3.astype(jnp.float32), ref3.astype(jnp.float32),
                        atol=1e-2, rtol=1e-2)

    print("KERNEL_OK")
</pallas_src>

<mosaic_0001>
module attributes {stable_mosaic.version = 11 : i64} {
  func.func @_swiglu_fused_kernel(%arg0: i32, %arg1: memref<60x20xf32, #tpu.memory_space<vmem>>, %arg2: memref<60x10xf32, #tpu.memory_space<vmem>>) attributes {dimension_semantics = [#tpu.dimension_semantics<parallel>], iteration_bounds = array<i64: 1>, scalar_prefetch = 0 : i64, scratch_operands = 0 : i64, tpu.core_type = #tpu.core_type<tc>, window_params = [{transform_indices = @transform_0, window_bounds = array<i64: 60, 20>}, {transform_indices = @transform_1, window_bounds = array<i64: 60, 10>}]} {
    %c0 = arith.constant 0 : index
    %c0_0 = arith.constant 0 : index
    %0 = vector.load %arg1[%c0, %c0_0] : memref<60x20xf32, #tpu.memory_space<vmem>>, vector<60x20xf32>
    %1 = vector.extract_strided_slice %0 {offsets = [0, 0], sizes = [60, 10], strides = [1, 1]} : vector<60x20xf32> to vector<60x10xf32>
    %2 = vector.extract_strided_slice %0 {offsets = [0, 10], sizes = [60, 10], strides = [1, 1]} : vector<60x20xf32> to vector<60x10xf32>
    %3 = arith.negf %2 : vector<60x10xf32>
    %4 = math.exp %3 : vector<60x10xf32>
    %cst = arith.constant 1.000000e+00 : f32
    %5 = vector.broadcast %cst : f32 to vector<60x10xf32>
    %6 = arith.addf %5, %4 : vector<60x10xf32>
    %7 = arith.divf %5, %6 : vector<60x10xf32>
    %8 = arith.mulf %2, %7 : vector<60x10xf32>
    %9 = arith.mulf %1, %8 : vector<60x10xf32>
    %c0_1 = arith.constant 0 : index
    %c0_2 = arith.constant 0 : index
    %10 = vector.load %arg2[%c0_1, %c0_2] : memref<60x10xf32, #tpu.memory_space<vmem>>, vector<60x10xf32>
    tpu.vector_store %arg2[%c0_1, %c0_2], %9 {strides = array<i32>} : memref<60x10xf32, #tpu.memory_space<vmem>>, vector<60x10xf32>,
    return
  }
  func.func @transform_0(%arg0: i32) -> (i32, i32) {
    %c0_i32 = arith.constant 0 : i32
    %c0_i32_0 = arith.constant 0 : i32
    return %arg0, %c0_i32 : i32, i32
  }
  func.func @transform_1(%arg0: i32) -> (i32, i32) {
    %c0_i32 = arith.constant 0 : i32
    %c0_i32_0 = arith.constant 0 : i32
    return %arg0, %c0_i32 : i32, i32
  }
}

</mosaic_0001>

<llo_original>
// kernel: tpu_custom_call.1
$region0: #{tpu_custom_call.1}
  #allocation0 [shape = 'u32[]', space=smem, size = 0x4, offset = 0x4, fixed_abs, tag = 'smem constant byte address 0x4 - core index']
  #allocation1 [shape = 'u32[144,128]{1,0:T(1,128)}', space=vmem, size = 0x12000, scoped, tag = 'internal scratch']
  %s0 = inlined_call_operand.vmem [shape: f32[60,20], index: 0, kind: input, shape index: {}]
  %s1 = inlined_call_operand.vmem [shape: f32[60,10], index: 1, kind: output, shape index: {}]
  %s2 = sld [smem:[#allocation0]]
  $region14: #{tpu_custom_call.1} parent=0
    _
  %s4 = ssub.s32 1, %s2
  %s5 = scalar_select 0, %s4, %s2
  // Predicated region
  $region2: #{tpu_custom_call.1} parent=0 // pred_check
    _
  $region3: #{tpu_custom_call.1} parent=0 // pred_check_branch
    %7 = sbr.rel (0) target = $region5
  $region4: #{tpu_custom_call.1} parent=0 // pred_region
    _
  $region5: #{tpu_custom_call.1} parent=0 // pred_fallthru
    _
  %v8 = vld [vmem:[%s0] sm:$0xff]
  %v9 = vld [vmem:[%s0 + $0x8] sm:$0xff]
  %v10 = vld [vmem:[%s0 + $0x10] sm:$0xff]
  %v11 = vld [vmem:[%s0 + $0x18] sm:$0xff]
  %v12 = vld [vmem:[%s0 + $0x20] sm:$0xff]
  %v13 = vld [vmem:[%s0 + $0x28] sm:$0xff]
  %v14 = vld [vmem:[%s0 + $0x30] sm:$0xff]
  %v15 = vld [vmem:[%s0 + $0x38] sm:$0xf]
  %v16 = vxor.u32 %v8, 2147483648
  %v17 = vxor.u32 %v9, 2147483648
  %v18 = vxor.u32 %v10, 2147483648
  %v19 = vxor.u32 %v11, 2147483648
  %v20 = vxor.u32 %v12, 2147483648
  %v21 = vxor.u32 %v13, 2147483648
  %v22 = vxor.u32 %v14, 2147483648
  %v23 = vxor.u32 %v15, 2147483648
  %v24 = vmul.f32 %v16, 1.442695
  %v25 = vpow.pop %v24
  %v26 = vmul.f32 %v17, 1.442695
  %v27 = vpow.pop %v26
  %v28 = vmul.f32 %v18, 1.442695
  %v29 = vpow.pop %v28
  %v30 = vmul.f32 %v19, 1.442695
  %v31 = vpow.pop %v30
  %v32 = vmul.f32 %v20, 1.442695
  %v33 = vpow.pop %v32
  %v34 = vmul.f32 %v21, 1.442695
  %v35 = vpow.pop %v34
  %v36 = vmul.f32 %v22, 1.442695
  %v37 = vpow.pop %v36
  %v38 = vmul.f32 %v23, 1.442695
  %v39 = vpow.pop %v38
  %v40 = vadd.f32 %v25, 1.0
  %v41 = vadd.f32 %v27, 1.0
  %v42 = vadd.f32 %v29, 1.0
  %v43 = vadd.f32 %v31, 1.0
  %v44 = vadd.f32 %v33, 1.0
  %v45 = vadd.f32 %v35, 1.0
  %v46 = vadd.f32 %v37, 1.0
  %v47 = vadd.f32 %v39, 1.0
  %v48 = vrcp.pop %v40
  %v49 = vmul.f32 1.0, %v48
  %v50 = vrcp.pop %v41
  %v51 = vmul.f32 1.0, %v50
  %v52 = vrcp.pop %v42
  %v53 = vmul.f32 1.0, %v52
  %v54 = vrcp.pop %v43
  %v55 = vmul.f32 1.0, %v54
  %v56 = vrcp.pop %v44
  %v57 = vmul.f32 1.0, %v56
  %v58 = vrcp.pop %v45
  %v59 = vmul.f32 1.0, %v58
  %v60 = vrcp.pop %v46
  %v61 = vmul.f32 1.0, %v60
  %v62 = vrcp.pop %v47
  %v63 = vmul.f32 1.0, %v62
  %v64 = vmul.f32 %v8, %v49
  %v65 = vmul.f32 %v9, %v51
  %v66 = vmul.f32 %v10, %v53
  %v67 = vmul.f32 %v11, %v55
  %v68 = vmul.f32 %v12, %v57
  %v69 = vmul.f32 %v13, %v59
  %v70 = vmul.f32 %v14, %v61
  %v71 = vmul.f32 %v15, %v63
  %80 = vrot.lane.b32.xlu0 %v64, 118
  %v81 = vpop.permute.xlu0 %80
  %82 = vrot.lane.b32.xlu0 %v65, 118
  %v83 = vpop.permute.xlu0 %82
  %84 = vrot.lane.b32.xlu0 %v66, 118
  %v85 = vpop.permute.xlu0 %84
  %86 = vrot.lane.b32.xlu0 %v67, 118
  %v87 = vpop.permute.xlu0 %86
  %88 = vrot.lane.b32.xlu0 %v68, 118
  %v89 = vpop.permute.xlu0 %88
  %90 = vrot.lane.b32.xlu0 %v69, 118
  %v91 = vpop.permute.xlu0 %90
  %92 = vrot.lane.b32.xlu0 %v70, 118
  %v93 = vpop.permute.xlu0 %92
  %94 = vrot.lane.b32.xlu0 %v71, 118
  %v95 = vpop.permute.xlu0 %94
  %v104 = vmul.f32 %v8, %v81
  %v105 = vmul.f32 %v9, %v83
  %v106 = vmul.f32 %v10, %v85
  %v107 = vmul.f32 %v11, %v87
  %v108 = vmul.f32 %v12, %v89
  %v109 = vmul.f32 %v13, %v91
  %v110 = vmul.f32 %v14, %v93
  %v111 = vmul.f32 %v15, %v95
  %vm112 = vcmask 80896
  %113 = vst.msk [vmem:[%s1] sm:$0xff] %vm112, %v104
  %114 = vst.msk [vmem:[%s1 + $0x8] sm:$0xff] %vm112, %v105
  %115 = vst.msk [vmem:[%s1 + $0x10] sm:$0xff] %vm112, %v106
  %116 = vst.msk [vmem:[%s1 + $0x18] sm:$0xff] %vm112, %v107
  %117 = vst.msk [vmem:[%s1 + $0x20] sm:$0xff] %vm112, %v108
  %118 = vst.msk [vmem:[%s1 + $0x28] sm:$0xff] %vm112, %v109
  %119 = vst.msk [vmem:[%s1 + $0x30] sm:$0xff] %vm112, %v110
  %vm120 = vcmask 76800
  %121 = vst.msk [vmem:[%s1 + $0x38] sm:$0xf] %vm120, %v111
  // Predicated region
  $region6: #{tpu_custom_call.1} parent=0 // pred_check
    _
  $region7: #{tpu_custom_call.1} parent=0 // pred_check_branch
    %123 = sbr.rel (0) target = $region9
  $region8: #{tpu_custom_call.1} parent=0 // pred_region
    _
  $region9: #{tpu_custom_call.1} parent=0 // pred_fallthru
    _
  // Predicated region
  $region10: #{tpu_custom_call.1} parent=0 // pred_check
    _
  $region11: #{tpu_custom_call.1} parent=0 // pred_check_branch
    %125 = sbr.rel (0) target = $region13
  $region12: #{tpu_custom_call.1} parent=0 // pred_region
    _
  $region13: #{tpu_custom_call.1} parent=0 // pred_fallthru
    _

</llo_original>
